<compile_context>
chip_gen: v7x
topology: tpu7x:2x2x1
jax: 0.10.0
libtpu: 0.0.40
codegen_flags: <defaults>
</compile_context>

<pallas_src>
import math

import jax
import jax.numpy as jnp
from jax import lax
from jax.experimental import pallas as pl
from jax.experimental.pallas import tpu as pltpu


def _round_up(x, m):
    return ((x + m - 1) // m) * m


def _sublane_granularity(dtype):
    # Sub-32-bit dtypes pack along sublanes: 8 rows for 4-byte, 16 for 2-byte,
    # 32 for 1-byte elements keeps blocks vreg-native on all generations.
    return {4: 8, 2: 16, 1: 32}.get(jnp.dtype(dtype).itemsize, 8)


# Contract the last dim of x (tm, tk) with the last dim of W (tn, tk):
# exactly F.linear's x @ W^T, with the weight kept in its native (OUT, IN)
# layout so the wrapper never transposes it in HBM.
_DN_X_WT = (((1,), (1,)), ((), ()))


def _meta_linear_kernel_kloop(x_ref, w_ref, b_ref, o_ref, acc_ref):
    """Multi-step K reduction: f32 accumulator, bias folded into the k==0 init."""
    k = pl.program_id(2)

    @pl.when(k == 0)
    def _init():
        acc_ref[...] = jnp.broadcast_to(b_ref[...], acc_ref.shape)

    acc_ref[...] += lax.dot_general(
        x_ref[...], w_ref[...],
        dimension_numbers=_DN_X_WT,
        preferred_element_type=jnp.float32,
    )

    @pl.when(k == pl.num_programs(2) - 1)
    def _finalize():
        o_ref[...] = acc_ref[...].astype(o_ref.dtype)


def _meta_linear_kernel_kfold(x_ref, w_ref, b_ref, o_ref):
    """Whole K folded into one block: no scratch, no accumulator RMW."""
    acc = lax.dot_general(
        x_ref[...], w_ref[...],
        dimension_numbers=_DN_X_WT,
        preferred_element_type=jnp.float32,
    )
    o_ref[...] = (acc + b_ref[...]).astype(o_ref.dtype)


def meta_linear(x, weight, bias, *, compute_dtype=None,
                tm_max=256, tn_max=512, tk_max=1024,
                max_k_fold_bytes=24 << 20):
    """Pallas equivalent of MetaLinear.forward: F.linear(x, weight, bias).

    x: (..., IN), weight: (OUT, IN) [PyTorch convention, kept as-is], bias: (OUT,).
    compute_dtype: optionally cast x/weight (e.g. jnp.bfloat16) for MXU peak;
                   accumulation is always f32, output keeps x's original dtype.
    """
    orig_shape = x.shape
    IN = orig_shape[-1]
    OUT, IN_w = weight.shape
    assert IN == IN_w, "in_features mismatch"

    out_dtype = x.dtype
    if compute_dtype is not None:
        x = x.astype(compute_dtype)
        weight = weight.astype(compute_dtype)

    x2d = x.reshape(-1, IN)
    B = x2d.shape[0]

    in_isz = jnp.dtype(x2d.dtype).itemsize
    w_isz = jnp.dtype(weight.dtype).itemsize
    out_isz = jnp.dtype(out_dtype).itemsize

    # ---------------- tile selection ----------------
    # M tile: dtype-aware sublane granularity (x tile + output tile rows).
    sub_m = max(_sublane_granularity(x2d.dtype), _sublane_granularity(out_dtype))
    tm_cap = max(sub_m, (tm_max // sub_m) * sub_m)
    tm = min(tm_cap, _round_up(B, sub_m))

    # N / K tiles: lane granularity is 128; prefer 256-multiples so a single
    # block fills the 2x256x256 MXU on v6e/v7x (v5e's 4x128x128 is fine too).
    n_gran = 256 if OUT > 128 else 128
    tn = min(tn_max, _round_up(OUT, n_gran))
    k_gran = 256 if IN > 128 else 128
    tk = min(tk_max, _round_up(IN, k_gran))

    # Whole-K folding: if the double-buffered x/W slabs over the full (padded)
    # K fit the budget, drop the K grid axis (no accumulator read-modify-write).
    K_full = _round_up(IN, k_gran)
    fold_bytes = 2 * (tm * K_full * in_isz + tn * K_full * w_isz
                      + tn * 4 + tm * tn * out_isz)
    if fold_bytes <= max_k_fold_bytes:
        tk = K_full

    # v7x megacore: ensure the (M, N) "parallel" grid has >= 2 blocks when the
    # problem allows, so both TensorCores get work (no-op on v5e/v6e).
    def _parallel_blocks(tm_, tn_):
        return (_round_up(B, tm_) // tm_) * (_round_up(OUT, tn_) // tn_)

    while _parallel_blocks(tm, tn) < 2:
        if tn > 128:
            tn //= 2
        else:
            tm_new = _round_up(max(sub_m, tm // 2), sub_m)
            if sub_m <= tm_new < tm:
                tm = tm_new
            else:
                break

    M_pad = _round_up(B, tm)
    N_pad = _round_up(OUT, tn)
    K_pad = _round_up(IN, tk)
    grid_m, grid_n, grid_k = M_pad // tm, N_pad // tn, K_pad // tk
    single_k = grid_k == 1

    # ---------------- one-time HBM glue (no weight transpose, pad only if needed) ----------------
    x_p = x2d
    if (M_pad, K_pad) != (B, IN):
        x_p = jnp.pad(x2d, ((0, M_pad - B), (0, K_pad - IN)))
    w_p = weight
    if (N_pad, K_pad) != (OUT, IN):
        w_p = jnp.pad(weight, ((0, N_pad - OUT), (0, K_pad - IN)))
    b2d = bias.astype(jnp.float32).reshape(1, OUT)
    if N_pad != OUT:
        b2d = jnp.pad(b2d, ((0, 0), (0, N_pad - OUT)))

    # ---------------- VMEM budget & cost hint ----------------
    acc_bytes = 0 if single_k else tm * tn * 4
    vmem_bytes = (2 * (tm * tk * in_isz + tn * tk * w_isz
                       + tn * 4 + tm * tn * out_isz) + acc_bytes)
    vmem_limit = int(min(64 << 20, max(vmem_bytes + (4 << 20), 16 << 20)))

    cost = pl.CostEstimate(
        flops=2 * M_pad * N_pad * K_pad,
        transcendentals=0,
        bytes_accessed=(M_pad * K_pad * in_isz * grid_n     # x re-streamed per N tile
                        + N_pad * K_pad * w_isz * grid_m    # W re-streamed per M tile
                        + M_pad * N_pad * out_isz
                        + N_pad * 4),
    )

    # ---------------- pallas_call ----------------
    if single_k:
        grid = (grid_m, grid_n)
        in_specs = [
            pl.BlockSpec((tm, K_pad), lambda i, j: (i, 0)),   # x slab (full K)
            pl.BlockSpec((tn, K_pad), lambda i, j: (j, 0)),   # W slab (OUT, IN) layout
            pl.BlockSpec((1, tn), lambda i, j: (0, j)),       # bias tile (f32)
        ]
        out_spec = pl.BlockSpec((tm, tn), lambda i, j: (i, j))
        scratch = []
        kernel = _meta_linear_kernel_kfold
        dim_sem = ("parallel", "parallel")
    else:
        grid = (grid_m, grid_n, grid_k)
        in_specs = [
            pl.BlockSpec((tm, tk), lambda i, j, k: (i, k)),   # x tile
            pl.BlockSpec((tn, tk), lambda i, j, k: (j, k)),   # W tile, no transpose
            pl.BlockSpec((1, tn), lambda i, j, k: (0, j)),    # bias tile (f32)
        ]
        out_spec = pl.BlockSpec((tm, tn), lambda i, j, k: (i, j))
        scratch = [pltpu.VMEM((tm, tn), jnp.float32)]
        kernel = _meta_linear_kernel_kloop
        dim_sem = ("parallel", "parallel", "arbitrary")

    out = pl.pallas_call(
        kernel,
        out_shape=jax.ShapeDtypeStruct((M_pad, N_pad), out_dtype),
        grid_spec=pltpu.PrefetchScalarGridSpec(
            num_scalar_prefetch=0,
            grid=grid,
            in_specs=in_specs,
            out_specs=out_spec,
            scratch_shapes=scratch,
        ),
        compiler_params=pltpu.CompilerParams(
            dimension_semantics=dim_sem,
            vmem_limit_bytes=vmem_limit,
        ),
        cost_estimate=cost,
    )(x_p, w_p, b2d)

    out = out[:B, :OUT]
    return out.reshape(orig_shape[:-1] + (OUT,))


def init_meta_linear_params(key, in_features, out_features, dtype=jnp.float32):
    """Deterministic init mirroring nn.Linear's default (Kaiming-uniform-ish)."""
    k_w, k_b = jax.random.split(key)
    bound = 1.0 / math.sqrt(in_features)
    weight = jax.random.uniform(
        k_w, (out_features, in_features), dtype=dtype, minval=-bound, maxval=bound
    )
    bias = jax.random.uniform(
        k_b, (out_features,), dtype=dtype, minval=-bound, maxval=bound
    )
    return weight, bias


# TODO(synk): MetaModule's parameter bookkeeping (named_params / update_params /
# set_param) is host-side training machinery, not a forward op — not a kernel.

if __name__ == "__main__":
    key = jax.random.PRNGKey(0)
    k_x1, k_p1, k_x2, k_p2, k_x3, k_p3 = jax.random.split(key, 6)

    # Case 1: the original small MetaLinear demo shape — whole-K fold, single
    # lane-dense (8, 128) output slab, no accumulator scratch.
    batch, in_features, out_features = 8, 32, 64
    x1 = jax.random.normal(k_x1, (batch, in_features), dtype=jnp.float32)
    w1, b1 = init_meta_linear_params(k_p1, in_features, out_features)
    out1 = jax.block_until_ready(meta_linear(x1, w1, b1))
    ref1 = x1 @ w1.T + b1
    assert out1.shape == ref1.shape
    assert jnp.allclose(out1, ref1, atol=1e-5, rtol=1e-5)

    # Case 2: 3-D input (F.linear allows leading dims); exercises the
    # no-transpose (OUT, IN) weight path and the megacore N-split.
    IN2, OUT2 = 320, 192
    x2 = jax.random.normal(k_x2, (2, 8, IN2), dtype=jnp.float32)
    w2, b2 = init_meta_linear_params(k_p2, IN2, OUT2)
    out2 = jax.block_until_ready(meta_linear(x2, w2, b2))
    ref2 = jnp.einsum("...i,oi->...o", x2, w2) + b2
    assert out2.shape == ref2.shape
    assert jnp.allclose(out2, ref2, atol=1e-4, rtol=1e-4)

    # Case 3: force the multi-step K pipeline (f32 accumulator, bias folded at
    # k==0) by disabling whole-K folding and capping tk, so the pl.when
    # init/accumulate/finalize path is exercised at small shapes.
    IN3, OUT3 = 384, 256
    x3 = jax.random.normal(k_x3, (16, IN3), dtype=jnp.float32)
    w3, b3 = init_meta_linear_params(k_p3, IN3, OUT3)
    out3 = jax.block_until_ready(
        meta_linear(x3, w3, b3, tk_max=128, max_k_fold_bytes=0))
    ref3 = x3 @ w3.T + b3
    assert out3.shape == ref3.shape
    assert jnp.allclose(out3, ref3, atol=1e-4, rtol=1e-4)

    print("KERNEL_OK")
</pallas_src>

<mosaic_0001>
module attributes {stable_mosaic.version = 11 : i64} {
  func.func @_meta_linear_kernel_kfold(%arg0: i32, %arg1: i32, %arg2: memref<8x128xf32, #tpu.memory_space<vmem>>, %arg3: memref<128x128xf32, #tpu.memory_space<vmem>>, %arg4: memref<1x128xf32, #tpu.memory_space<vmem>>, %arg5: memref<8x128xf32, #tpu.memory_space<vmem>>) attributes {dimension_semantics = [#tpu.dimension_semantics<parallel>, #tpu.dimension_semantics<parallel>], iteration_bounds = array<i64: 1, 1>, scalar_prefetch = 0 : i64, scratch_operands = 0 : i64, tpu.core_type = #tpu.core_type<tc>, window_params = [{transform_indices = @transform_0, window_bounds = array<i64: 8, 128>}, {transform_indices = @transform_1, window_bounds = array<i64: 128, 128>}, {transform_indices = @transform_2, window_bounds = array<i64: 1, 128>}, {transform_indices = @transform_3, window_bounds = array<i64: 8, 128>}]} {
    %c0 = arith.constant 0 : index
    %c0_0 = arith.constant 0 : index
    %0 = vector.load %arg2[%c0, %c0_0] : memref<8x128xf32, #tpu.memory_space<vmem>>, vector<8x128xf32>
    %c0_1 = arith.constant 0 : index
    %c0_2 = arith.constant 0 : index
    %1 = vector.load %arg3[%c0_1, %c0_2] : memref<128x128xf32, #tpu.memory_space<vmem>>, vector<128x128xf32>
    %cst = arith.constant dense<0.000000e+00> : vector<8x128xf32>
    %2 = tpu.matmul %0, %1, %cst {dimension_numbers = #tpu.dot_dimension_numbers<[1], [1], [0], [0], [0, 0, 1, 0], [], []>} : vector<8x128xf32>, vector<128x128xf32>, vector<8x128xf32> -> vector<8x128xf32>
    %c0_3 = arith.constant 0 : index
    %c0_4 = arith.constant 0 : index
    %3 = vector.load %arg4[%c0_3, %c0_4] : memref<1x128xf32, #tpu.memory_space<vmem>>, vector<1x128xf32>
    %4 = vector.broadcast %3 : vector<1x128xf32> to vector<8x128xf32>
    %5 = arith.addf %2, %4 : vector<8x128xf32>
    %c0_5 = arith.constant 0 : index
    %c0_6 = arith.constant 0 : index
    %6 = vector.load %arg5[%c0_5, %c0_6] : memref<8x128xf32, #tpu.memory_space<vmem>>, vector<8x128xf32>
    tpu.vector_store %arg5[%c0_5, %c0_6], %5 {strides = array<i32>} : memref<8x128xf32, #tpu.memory_space<vmem>>, vector<8x128xf32>,
    return
  }
  func.func @transform_0(%arg0: i32, %arg1: i32) -> (i32, i32) {
    %c0_i32 = arith.constant 0 : i32
    %c0_i32_0 = arith.constant 0 : i32
    return %arg0, %c0_i32 : i32, i32
  }
  func.func @transform_1(%arg0: i32, %arg1: i32) -> (i32, i32) {
    %c0_i32 = arith.constant 0 : i32
    %c0_i32_0 = arith.constant 0 : i32
    return %arg1, %c0_i32 : i32, i32
  }
  func.func @transform_2(%arg0: i32, %arg1: i32) -> (i32, i32) {
    %c0_i32 = arith.constant 0 : i32
    %c0_i32_0 = arith.constant 0 : i32
    return %c0_i32, %arg1 : i32, i32
  }
  func.func @transform_3(%arg0: i32, %arg1: i32) -> (i32, i32) {
    %c0_i32 = arith.constant 0 : i32
    return %arg0, %arg1 : i32, i32
  }
}

</mosaic_0001>

<llo_original>
// kernel: tpu_custom_call.1
$region0: #{tpu_custom_call.1}
  #allocation0 [shape = 'u32[]', space=smem, size = 0x4, offset = 0x4, fixed_abs, tag = 'smem constant byte address 0x4 - core index']
  #allocation1 [shape = 'u32[144,128]{1,0:T(1,128)}', space=vmem, size = 0x12000, scoped, tag = 'internal scratch']
  %s0 = inlined_call_operand.hbm [shape: f32[8,128], index: 0, kind: input, shape index: {}]
  %s1 = inlined_call_operand.hbm [shape: f32[128,128], index: 1, kind: input, shape index: {}]
  %s2 = inlined_call_operand.vmem [shape: f32[1,128], index: 2, kind: input, shape index: {}]
  %s3 = inlined_call_operand.hbm [shape: f32[8,128], index: 3, kind: output, shape index: {}]
  %s4 = sld [smem:[#allocation0]]
  $region30: #{tpu_custom_call.1} parent=0
    _
  %s6 = ssub.s32 1, %s4
  %s7 = scalar_select 0, %s6, %s4
  $region1: #{tpu_custom_call.1} parent=0
    #allocation2 [shape = 'u8[4096]{0}', space=vmem, size = 0x1000, scoped, tag = 'input window, operand 0, single buffered']
    #allocation3 [shape = 's32[1]{0}', space=sflag, size = 0x4, scoped, tag = 'scoped memory for tpu_custom_call.1']
    #allocation4 [shape = 's32[1]{0}', space=sflag, size = 0x4, scoped, tag = 'scoped memory for tpu_custom_call.1']
    #allocation5 [shape = 'u8[65536]{0}', space=vmem, size = 0x10000, scoped, tag = 'input window, operand 1, single buffered']
    #allocation6 [shape = 's32[1]{0}', space=sflag, size = 0x4, scoped, tag = 'scoped memory for tpu_custom_call.1']
    #allocation7 [shape = 'u8[4096]{0}', space=vmem, size = 0x1000, scoped, tag = 'output window, operand 0, single buffered']
    %8 = vsyncpa [#allocation3], 0
    %9 = vsyncpa [#allocation6], 0
    %10 = vsyncpa [#allocation4], 0
    // Predicated region
    $region2: #{tpu_custom_call.1} parent=1 // pred_check
      _
    $region3: #{tpu_custom_call.1} parent=1 // pred_check_branch
      %12 = sbr.rel (0) target = $region5
    $region4: #{tpu_custom_call.1} parent=1 // pred_region
      %s14 = ssub.s32 128, 128
      %15 = vsyncadd [#allocation3], %s14
      %s17 = sshll.u32 [#allocation2], 4
      %s18 = int_to_ptr.vmem [resolvable:$true] %s17
      %20 = dma.hbm_to_vmem [thread:$0]  %s0, 128, %s18, [#allocation3]
    $region5: #{tpu_custom_call.1} parent=1 // pred_fallthru
      _
    // Predicated region
    $region6: #{tpu_custom_call.1} parent=1 // pred_check
      _
    $region7: #{tpu_custom_call.1} parent=1 // pred_check_branch
      %22 = sbr.rel (0) target = $region9
    $region8: #{tpu_custom_call.1} parent=1 // pred_region
      %s24 = ssub.s32 2048, 2048
      %25 = vsyncadd [#allocation6], %s24
      %s26 = sshll.u32 [#allocation5], 4
      %s27 = int_to_ptr.vmem [resolvable:$true] %s26
      %32 = dma.hbm_to_vmem [thread:$0]  %s1, 2048, %s27, [#allocation6], 128, 128, 8
    $region9: #{tpu_custom_call.1} parent=1 // pred_fallthru
      _
    // Predicated region
    $region10: #{tpu_custom_call.1} parent=1 // pred_check
      _
    $region11: #{tpu_custom_call.1} parent=1 // pred_check_branch
      %34 = sbr.rel (0) target = $region13
    $region12: #{tpu_custom_call.1} parent=1 // pred_region
      _
    $region13: #{tpu_custom_call.1} parent=1 // pred_fallthru
      _
    // Predicated region
    $region14: #{tpu_custom_call.1} parent=1 // pred_check
      _
    $region15: #{tpu_custom_call.1} parent=1 // pred_check_branch
      %36 = sbr.rel (0) target = $region17
    $region16: #{tpu_custom_call.1} parent=1 // pred_region
      %37 = dma.done [#allocation3], 128
    $region17: #{tpu_custom_call.1} parent=1 // pred_fallthru
      _
    // Predicated region
    $region18: #{tpu_custom_call.1} parent=1 // pred_check
      _
    $region19: #{tpu_custom_call.1} parent=1 // pred_check_branch
      %39 = sbr.rel (0) target = $region21
    $region20: #{tpu_custom_call.1} parent=1 // pred_region
      %40 = dma.done [#allocation6], 2048
    $region21: #{tpu_custom_call.1} parent=1 // pred_fallthru
      _
    %v41 = vld [vmem:[#allocation2] sm:$0xff]
    %v42 = vld [vmem:[#allocation5] sm:$0xff]
    %v43 = vld [vmem:[#allocation5 + $0x8] sm:$0xff]
    %v44 = vld [vmem:[#allocation5 + $0x10] sm:$0xff]
    %v45 = vld [vmem:[#allocation5 + $0x18] sm:$0xff]
    %v46 = vld [vmem:[#allocation5 + $0x20] sm:$0xff]
    %v47 = vld [vmem:[#allocation5 + $0x28] sm:$0xff]
    %v48 = vld [vmem:[#allocation5 + $0x30] sm:$0xff]
    %v49 = vld [vmem:[#allocation5 + $0x38] sm:$0xff]
    %v50 = vld [vmem:[#allocation5 + $0x40] sm:$0xff]
    %v51 = vld [vmem:[#allocation5 + $0x48] sm:$0xff]
    %v52 = vld [vmem:[#allocation5 + $0x50] sm:$0xff]
    %v53 = vld [vmem:[#allocation5 + $0x58] sm:$0xff]
    %v54 = vld [vmem:[#allocation5 + $0x60] sm:$0xff]
    %v55 = vld [vmem:[#allocation5 + $0x68] sm:$0xff]
    %v56 = vld [vmem:[#allocation5 + $0x70] sm:$0xff]
    %v57 = vld [vmem:[#allocation5 + $0x78] sm:$0xff]
    %v58 = vld [vmem:[%s2] sm:$0x1]
    %v60 = vlaneseq
    %v61 = vshrl.u32 %v60, 7
    %v62 = vsub.s32 0, %v61
    %v63 = vrot.slane %v58, %v62
    %65 = vmatprep.subr.mxu0 0.0
    %66 = vmatpush1.xpose.msra.mxu0 %v42
    %67 = vmatprep.subr.mxu0 0.0
    %68 = vmatpush1.xpose.msra.mxu0 %v43
    %69 = vmatprep.subr.mxu0 0.0
    %70 = vmatpush1.xpose.msra.mxu0 %v44
    %71 = vmatprep.subr.mxu0 0.0
    %72 = vmatpush1.xpose.msra.mxu0 %v45
    %73 = vmatprep.subr.mxu0 0.0
    %74 = vmatpush1.xpose.msra.mxu0 %v46
    %75 = vmatprep.subr.mxu0 0.0
    %76 = vmatpush1.xpose.msra.mxu0 %v47
    %77 = vmatprep.subr.mxu0 0.0
    %78 = vmatpush1.xpose.msra.mxu0 %v48
    %79 = vmatprep.subr.mxu0 0.0
    %80 = vmatpush1.xpose.msra.mxu0 %v49
    %81 = vmatprep.subr.mxu0 0.0
    %82 = vmatpush1.xpose.msra.mxu0 %v50
    %83 = vmatprep.subr.mxu0 0.0
    %84 = vmatpush1.xpose.msra.mxu0 %v51
    %85 = vmatprep.subr.mxu0 0.0
    %86 = vmatpush1.xpose.msra.mxu0 %v52
    %87 = vmatprep.subr.mxu0 0.0
    %88 = vmatpush1.xpose.msra.mxu0 %v53
    %89 = vmatprep.subr.mxu0 0.0
    %90 = vmatpush1.xpose.msra.mxu0 %v54
    %91 = vmatprep.subr.mxu0 0.0
    %92 = vmatpush1.xpose.msra.mxu0 %v55
    %93 = vmatprep.subr.mxu0 0.0
    %94 = vmatpush1.xpose.msra.mxu0 %v56
    %95 = vmatprep.subr.mxu0 0.0
    %96 = vmatpush1.xpose.msra.mxu0 %v57
    %97 = vmatprep.subr.mxu0 0.0
    %98 = vmatpush1.xpose.msra.mxu0 0.0
    %99 = vmatprep.subr.mxu0 0.0
    %100 = vmatpush1.xpose.msra.mxu0 0.0
    %101 = vmatprep.subr.mxu0 0.0
    %102 = vmatpush1.xpose.msra.mxu0 0.0
    %103 = vmatprep.subr.mxu0 0.0
    %104 = vmatpush1.xpose.msra.mxu0 0.0
    %105 = vmatprep.subr.mxu0 0.0
    %106 = vmatpush1.xpose.msra.mxu0 0.0
    %107 = vmatprep.subr.mxu0 0.0
    %108 = vmatpush1.xpose.msra.mxu0 0.0
    %109 = vmatprep.subr.mxu0 0.0
    %110 = vmatpush1.xpose.msra.mxu0 0.0
    %111 = vmatprep.subr.mxu0 0.0
    %112 = vmatpush1.xpose.msra.mxu0 0.0
    %113 = vmatprep.subr.mxu0 0.0
    %114 = vmatpush1.xpose.msra.mxu0 0.0
    %115 = vmatprep.subr.mxu0 0.0
    %116 = vmatpush1.xpose.msra.mxu0 0.0
    %117 = vmatprep.subr.mxu0 0.0
    %118 = vmatpush1.xpose.msra.mxu0 0.0
    %119 = vmatprep.subr.mxu0 0.0
    %120 = vmatpush1.xpose.msra.mxu0 0.0
    %121 = vmatprep.subr.mxu0 0.0
    %122 = vmatpush1.xpose.msra.mxu0 0.0
    %123 = vmatprep.subr.mxu0 0.0
    %124 = vmatpush1.xpose.msra.mxu0 0.0
    %125 = vmatprep.subr.mxu0 0.0
    %126 = vmatpush1.xpose.msra.mxu0 0.0
    %127 = vmatprep.subr.mxu0 0.0
    %128 = vmatpush1.xpose.msra.mxu0 0.0
    %129 = vmatprep.mubr.f32.mxu0 0.0
    %130 = vmatmul.mubr.f32.gmra.mrb[0].mxu0 %v41
    %v131 = vpop.f32.mrb[0].mxu0
    %v132 = vadd.f32 %v63, %v131
    %v133 = vpop.f32.mrb[0].mxu0
    %134 = vdwg.mxu0
    %135 = vst [vmem:[#allocation7] sm:$0xff] %v132
    // Predicated region
    $region22: #{tpu_custom_call.1} parent=1 // pred_check
      _
    $region23: #{tpu_custom_call.1} parent=1 // pred_check_branch
      %137 = sbr.rel (0) target = $region25
    $region24: #{tpu_custom_call.1} parent=1 // pred_region
      %s139 = ssub.s32 128, 128
      %140 = vsyncadd [#allocation4], %s139
      %s142 = sshll.u32 [#allocation7], 4
      %s143 = int_to_ptr.vmem [resolvable:$true] %s142
      %145 = dma.vmem_to_hbm [thread:$0]  %s143, 128, %s3, [#allocation4]
    $region25: #{tpu_custom_call.1} parent=1 // pred_fallthru
      _
    // Predicated region
    $region26: #{tpu_custom_call.1} parent=1 // pred_check
      _
    $region27: #{tpu_custom_call.1} parent=1 // pred_check_branch
      %147 = sbr.rel (0) target = $region29
    $region28: #{tpu_custom_call.1} parent=1 // pred_region
      %148 = dma.done [#allocation4], 128
    $region29: #{tpu_custom_call.1} parent=1 // pred_fallthru
      _
    %149 = vsyncpa [#allocation3], 1
    %150 = vsyncpa [#allocation6], 1
    %151 = vsyncpa [#allocation4], 1

</llo_original>
